<compile_context>
chip_gen: v7x
topology: tpu7x:2x2x1
jax: 0.10.0
libtpu: 0.0.40
codegen_flags: <defaults>
</compile_context>

<pallas_src>
import functools

import jax
import jax.numpy as jnp
from jax.experimental import pallas as pl
from jax.experimental.pallas import tpu as pltpu


def _round_up(x, m):
    return (x + m - 1) // m * m


def _vmem_capacity_bytes():
    # 128 MiB on v5e/v6e, 64 MiB per TensorCore on v7x.  Conservative default
    # (v7x number) if the query is unavailable.
    try:
        return int(pltpu.get_tpu_info().vmem_capacity_bytes)
    except Exception:
        return 64 * 1024 * 1024


def _vmem_budget():
    cap = _vmem_capacity_bytes()
    # Leave headroom for Mosaic's internal scratch + the tiny MLP weights.
    vmem_limit = min(cap * 3 // 4, 96 * 1024 * 1024)
    # Double-buffered input (2x) + double-buffered output (2x) slabs must fit.
    max_block_bytes = max(1 << 20, (vmem_limit - (6 << 20)) // 4)
    return vmem_limit, max_block_bytes


def _pick_bn(n, bytes_per_batch, max_block_bytes):
    """Largest batch tile that fits the VMEM budget.

    Prefers >= 4 grid steps with an even count (>= 2 steps per v7x TensorCore
    so the pipeline overlaps and both cores stay balanced), then >= 2 steps,
    then the biggest fit.  Returns None if even a single batch does not fit.
    """
    divisors = [d for d in range(1, n + 1) if n % d == 0]
    fit = [d for d in divisors if d * bytes_per_batch <= max_block_bytes]
    if not fit:
        return None
    best4 = [d for d in fit if n // d >= 4 and (n // d) % 2 == 0]
    if best4:
        return max(best4)
    best2 = [d for d in fit if n // d >= 2]
    if best2:
        return max(best2)
    return max(fit)


# ----------------------------------------------------------------------------
# Main (single-pass) kernel: pool + MLP + rescale on one (Bn, C, HW) slab.
# ----------------------------------------------------------------------------
def _ca_kernel(x_ref, w1t_ref, b1_ref, w2t_ref, b2_ref, o_ref, *, inv_hw):
    # Pool: f32 accumulation over the lane (spatial) axis.  No bound f32 copy
    # of the whole block is kept live across the MLP.
    pooled = jnp.sum(x_ref[...].astype(jnp.float32), axis=-1) * inv_hw  # (Bn, C)

    # Tiny batched channel MLP -- off the HBM-bound critical path.
    h = jnp.dot(pooled, w1t_ref[...], preferred_element_type=jnp.float32)
    h = jnp.maximum(h + b1_ref[...], 0.0)                               # (Bn, C_r)
    s = jnp.dot(h, w2t_ref[...], preferred_element_type=jnp.float32)
    s = jax.nn.sigmoid(s + b2_ref[...])                                 # (Bn, C)

    # Per-channel rescale directly in the native dtype (no f32 intermediate).
    o_ref[...] = x_ref[...] * s.astype(o_ref.dtype)[:, :, None]


# ----------------------------------------------------------------------------
# Fallback (two-pass) kernels for slabs that exceed the VMEM budget.
# ----------------------------------------------------------------------------
def _pool_kernel(x_ref, sum_ref, *, hw, hw_t):
    h = pl.program_id(1)

    @pl.when(h == 0)
    def _():
        sum_ref[...] = jnp.zeros_like(sum_ref)

    # Mask the (possibly partial) last HW tile so the sum stays exact.
    lane = h * hw_t + jax.lax.broadcasted_iota(jnp.int32, x_ref.shape, 2)
    xf = jnp.where(lane < hw, x_ref[...].astype(jnp.float32), 0.0)
    sum_ref[...] += jnp.sum(xf, axis=-1)


def _rescale_kernel(x_ref, s_ref, o_ref):
    o_ref[...] = x_ref[...] * s_ref[...].astype(o_ref.dtype)[:, :, None]


def _ca_layer_two_pass(x, w1, b1, w2, b2, vmem_limit, max_block_bytes):
    """Pass 1: pooled sums (HW-tiled reduction). MLP in JAX. Pass 2: rescale."""
    N, C, HW = x.shape
    itemsize = x.dtype.itemsize
    c_pad = _round_up(C, max(8, 32 // itemsize))

    lanes = max(128, (max_block_bytes // (c_pad * itemsize)) // 128 * 128)
    hw_t = int(min(lanes, _round_up(HW, 128)))
    n_hw = pl.cdiv(HW, hw_t)

    sums = pl.pallas_call(
        functools.partial(_pool_kernel, hw=HW, hw_t=hw_t),
        out_shape=jax.ShapeDtypeStruct((N, C), jnp.float32),
        grid_spec=pltpu.PrefetchScalarGridSpec(
            num_scalar_prefetch=0,
            grid=(N, n_hw),
            in_specs=[pl.BlockSpec((1, C, hw_t), lambda n, h: (n, 0, h))],
            out_specs=pl.BlockSpec((1, C), lambda n, h: (n, 0)),
        ),
        compiler_params=pltpu.CompilerParams(
            dimension_semantics=("parallel", "arbitrary"),
            vmem_limit_bytes=vmem_limit,
        ),
        cost_estimate=pl.CostEstimate(
            flops=0,
            transcendentals=0,
            bytes_accessed=int(N * C * HW * itemsize + N * C * 4),
        ),
    )(x)

    # Tiny channel MLP in plain JAX (negligible next to the streaming passes).
    pooled = sums * (1.0 / HW)
    hmid = jnp.maximum(pooled @ w1.T.astype(jnp.float32) + b1.astype(jnp.float32), 0.0)
    s = jax.nn.sigmoid(hmid @ w2.T.astype(jnp.float32) + b2.astype(jnp.float32))

    out = pl.pallas_call(
        _rescale_kernel,
        out_shape=jax.ShapeDtypeStruct((N, C, HW), x.dtype),
        grid_spec=pltpu.PrefetchScalarGridSpec(
            num_scalar_prefetch=0,
            grid=(N, n_hw),
            in_specs=[
                pl.BlockSpec((1, C, hw_t), lambda n, h: (n, 0, h)),
                pl.BlockSpec((1, C), lambda n, h: (n, 0)),
            ],
            out_specs=pl.BlockSpec((1, C, hw_t), lambda n, h: (n, 0, h)),
        ),
        compiler_params=pltpu.CompilerParams(
            dimension_semantics=("parallel", "parallel"),
            vmem_limit_bytes=vmem_limit,
        ),
        cost_estimate=pl.CostEstimate(
            flops=int(N * C * HW),
            transcendentals=0,
            bytes_accessed=int(2 * N * C * HW * itemsize),
        ),
    )(x, s)
    return out


# ----------------------------------------------------------------------------
# Public wrapper.
# ----------------------------------------------------------------------------
def ca_layer(x_nchw, w1, b1, w2, b2, *, max_block_bytes=None):
    """Channel-attention layer (PyTorch CALayer forward).

    x_nchw : (N, C, H, W)
    w1     : (C_r, C)   -- Conv2d(C, C_r, 1) weight squeezed
    b1     : (C_r,)
    w2     : (C, C_r)   -- Conv2d(C_r, C, 1) weight squeezed
    b2     : (C,)
    returns (N, C, H, W)
    """
    N, C, H, W = x_nchw.shape
    C_r = w1.shape[0]
    HW = H * W
    itemsize = x_nchw.dtype.itemsize

    vmem_limit, derived_cap = _vmem_budget()
    if max_block_bytes is None:
        max_block_bytes = derived_cap

    x = x_nchw.reshape(N, C, HW)

    # VMEM footprint of one batch row of a (Bn, C, HW) block (Mosaic pads the
    # trailing two dims to the register tile).
    bytes_per_batch = (_round_up(C, max(8, 32 // itemsize))
                       * _round_up(HW, 128) * itemsize)
    Bn = _pick_bn(N, bytes_per_batch, max_block_bytes)

    if Bn is None:
        # Even one batch's (1, C, HW) slab exceeds the budget: two-pass path.
        out = _ca_layer_two_pass(x, w1, b1, w2, b2, vmem_limit, max_block_bytes)
        return out.reshape(N, C, H, W)

    # Pre-transpose the 1x1-conv weights so the in-kernel dots are plain
    # (Bn, C) @ (C, C_r) and (Bn, C_r) @ (C_r, C); biases lane-major.
    w1t = jnp.transpose(w1)          # (C, C_r)
    w2t = jnp.transpose(w2)          # (C_r, C)
    b1r = b1.reshape(1, C_r)
    b2r = b2.reshape(1, C)

    cost = pl.CostEstimate(
        flops=int(4 * N * C * C_r),               # the two tiny matmuls
        transcendentals=int(N * C),               # sigmoid
        bytes_accessed=int(2 * N * C * HW * itemsize),
    )

    # TODO(synk): if a v5e/v6e profile shows DMA bubbles at grid-step
    # boundaries, deepen the big in/out specs to pipeline_mode=pl.Buffered(3)
    # (VMEM headroom exists there, not on v7x).
    out = pl.pallas_call(
        functools.partial(_ca_kernel, inv_hw=1.0 / HW),
        out_shape=jax.ShapeDtypeStruct((N, C, HW), x.dtype),
        grid_spec=pltpu.PrefetchScalarGridSpec(
            num_scalar_prefetch=0,
            grid=(N // Bn,),
            in_specs=[
                pl.BlockSpec((Bn, C, HW), lambda n: (n, 0, 0)),
                pl.BlockSpec((C, C_r), lambda n: (0, 0)),
                pl.BlockSpec((1, C_r), lambda n: (0, 0)),
                pl.BlockSpec((C_r, C), lambda n: (0, 0)),
                pl.BlockSpec((1, C), lambda n: (0, 0)),
            ],
            out_specs=pl.BlockSpec((Bn, C, HW), lambda n: (n, 0, 0)),
        ),
        compiler_params=pltpu.CompilerParams(
            dimension_semantics=("parallel",),    # megacore-shard batch tiles
            vmem_limit_bytes=vmem_limit,
        ),
        cost_estimate=cost,
    )(x, w1t, b1r, w2t, b2r)

    return out.reshape(N, C, H, W)


def _reference(x, w1, b1, w2, b2):
    # Pure-JAX reference matching the PyTorch forward.
    y = jnp.mean(x, axis=(2, 3))                                 # (N, C)
    h = jnp.maximum(y @ w1.T + b1, 0.0)                          # (N, C_r)
    s = jax.nn.sigmoid(h @ w2.T + b2)                            # (N, C)
    return x * s[:, :, None, None]


if __name__ == "__main__":
    # Shapes consistent with CALayer(channel=64, reduction=16).
    N, C, H, W = 2, 64, 8, 8
    reduction = 16
    C_r = C // reduction

    key = jax.random.PRNGKey(0)
    kx, k1, k2, k3, k4, kx2 = jax.random.split(key, 6)

    x = jax.random.normal(kx, (N, C, H, W), dtype=jnp.float32)
    # Conv2d(C, C_r, 1) weight (C_r, C, 1, 1) -> squeeze (C_r, C); bias (C_r,)
    w1 = jax.random.normal(k1, (C_r, C), dtype=jnp.float32) * 0.1
    b1 = jax.random.normal(k2, (C_r,), dtype=jnp.float32) * 0.1
    # Conv2d(C_r, C, 1) weight (C, C_r, 1, 1) -> squeeze (C, C_r); bias (C,)
    w2 = jax.random.normal(k3, (C, C_r), dtype=jnp.float32) * 0.1
    b2 = jax.random.normal(k4, (C,), dtype=jnp.float32) * 0.1

    # Main single-pass path (HW = 64: exercises the no-pad, masked-tail-store
    # layout since HW % 128 != 0).
    out = ca_layer(x, w1, b1, w2, b2)
    out = jax.block_until_ready(out)
    ref = _reference(x, w1, b1, w2, b2)
    assert out.shape == (N, C, H, W)
    assert jnp.allclose(out, ref, atol=1e-5, rtol=1e-5), "main path mismatch"

    # Two-pass fallback path (forced via a tiny block budget) on a shape with
    # several HW tiles, checked against the same reference MLP.
    N2, C2, H2, W2 = 1, 16, 32, 32
    Cr2 = C2 // reduction
    x2 = jax.random.normal(kx2, (N2, C2, H2, W2), dtype=jnp.float32)
    w1b = w1[:Cr2, :C2]
    b1b = b1[:Cr2]
    w2b = w2[:C2, :Cr2]
    b2b = b2[:C2]
    out2 = ca_layer(x2, w1b, b1b, w2b, b2b, max_block_bytes=16 * 1024)
    out2 = jax.block_until_ready(out2)
    ref2 = _reference(x2, w1b, b1b, w2b, b2b)
    assert out2.shape == (N2, C2, H2, W2)
    assert jnp.allclose(out2, ref2, atol=1e-5, rtol=1e-5), "fallback mismatch"

    print("KERNEL_OK")
</pallas_src>

<mosaic_0001>
module attributes {stable_mosaic.version = 11 : i64} {
  func.func @_ca_kernel(%arg0: i32, %arg1: memref<1x64x64xf32, #tpu.memory_space<vmem>>, %arg2: memref<64x4xf32, #tpu.memory_space<vmem>>, %arg3: memref<1x4xf32, #tpu.memory_space<vmem>>, %arg4: memref<4x64xf32, #tpu.memory_space<vmem>>, %arg5: memref<1x64xf32, #tpu.memory_space<vmem>>, %arg6: memref<1x64x64xf32, #tpu.memory_space<vmem>>) attributes {dimension_semantics = [#tpu.dimension_semantics<parallel>], iteration_bounds = array<i64: 2>, scalar_prefetch = 0 : i64, scratch_operands = 0 : i64, tpu.core_type = #tpu.core_type<tc>, window_params = [{transform_indices = @transform_0, window_bounds = array<i64: 1, 64, 64>}, {pipeline_mode = #tpu.pipeline_mode<synchronous>, transform_indices = @transform_1, window_bounds = array<i64: 64, 4>}, {pipeline_mode = #tpu.pipeline_mode<synchronous>, transform_indices = @transform_2, window_bounds = array<i64: 1, 4>}, {pipeline_mode = #tpu.pipeline_mode<synchronous>, transform_indices = @transform_3, window_bounds = array<i64: 4, 64>}, {pipeline_mode = #tpu.pipeline_mode<synchronous>, transform_indices = @transform_4, window_bounds = array<i64: 1, 64>}, {transform_indices = @transform_5, window_bounds = array<i64: 1, 64, 64>}]} {
    %c0 = arith.constant 0 : index
    %c0_0 = arith.constant 0 : index
    %c0_1 = arith.constant 0 : index
    %0 = vector.load %arg1[%c0, %c0_0, %c0_1] : memref<1x64x64xf32, #tpu.memory_space<vmem>>, vector<1x64x64xf32>
    %cst = arith.constant dense<0.000000e+00> : vector<1x64xf32>
    %1 = vector.multi_reduction <add>, %0, %cst [2] : vector<1x64x64xf32> to vector<1x64xf32>
    %cst_2 = arith.constant 1.562500e-02 : f32
    %2 = vector.broadcast %cst_2 : f32 to vector<1x64xf32>
    %3 = arith.mulf %1, %2 : vector<1x64xf32>
    %c0_3 = arith.constant 0 : index
    %c0_4 = arith.constant 0 : index
    %4 = vector.load %arg2[%c0_3, %c0_4] : memref<64x4xf32, #tpu.memory_space<vmem>>, vector<64x4xf32>
    %cst_5 = arith.constant dense<0.000000e+00> : vector<1x4xf32>
    %5 = tpu.matmul %3, %4, %cst_5 {dimension_numbers = #tpu.dot_dimension_numbers<[1], [0], [0], [1], [0, 0, 1, 1], [], []>} : vector<1x64xf32>, vector<64x4xf32>, vector<1x4xf32> -> vector<1x4xf32>
    %c0_6 = arith.constant 0 : index
    %c0_7 = arith.constant 0 : index
    %6 = vector.load %arg3[%c0_6, %c0_7] : memref<1x4xf32, #tpu.memory_space<vmem>>, vector<1x4xf32>
    %7 = arith.addf %5, %6 : vector<1x4xf32>
    %cst_8 = arith.constant 0.000000e+00 : f32
    %8 = vector.broadcast %cst_8 : f32 to vector<1x4xf32>
    %9 = arith.maximumf %7, %8 : vector<1x4xf32>
    %c0_9 = arith.constant 0 : index
    %c0_10 = arith.constant 0 : index
    %10 = vector.load %arg4[%c0_9, %c0_10] : memref<4x64xf32, #tpu.memory_space<vmem>>, vector<4x64xf32>
    %cst_11 = arith.constant dense<0.000000e+00> : vector<1x64xf32>
    %11 = tpu.matmul %9, %10, %cst_11 {dimension_numbers = #tpu.dot_dimension_numbers<[1], [0], [0], [1], [0, 0, 1, 1], [], []>} : vector<1x4xf32>, vector<4x64xf32>, vector<1x64xf32> -> vector<1x64xf32>
    %c0_12 = arith.constant 0 : index
    %c0_13 = arith.constant 0 : index
    %12 = vector.load %arg5[%c0_12, %c0_13] : memref<1x64xf32, #tpu.memory_space<vmem>>, vector<1x64xf32>
    %13 = arith.addf %11, %12 : vector<1x64xf32>
    %14 = arith.negf %13 : vector<1x64xf32>
    %15 = math.exp %14 : vector<1x64xf32>
    %cst_14 = arith.constant 1.000000e+00 : f32
    %16 = vector.broadcast %cst_14 : f32 to vector<1x64xf32>
    %17 = arith.addf %16, %15 : vector<1x64xf32>
    %18 = arith.divf %16, %17 : vector<1x64xf32>
    %c0_15 = arith.constant 0 : index
    %c0_16 = arith.constant 0 : index
    %c0_17 = arith.constant 0 : index
    %19 = vector.load %arg1[%c0_15, %c0_16, %c0_17] : memref<1x64x64xf32, #tpu.memory_space<vmem>>, vector<1x64x64xf32>
    %20 = vector.shape_cast %18 : vector<1x64xf32> to vector<1x64x1xf32>
    %21 = vector.broadcast %20 : vector<1x64x1xf32> to vector<1x64x64xf32>
    %22 = arith.mulf %19, %21 : vector<1x64x64xf32>
    %c0_18 = arith.constant 0 : index
    %c0_19 = arith.constant 0 : index
    %c0_20 = arith.constant 0 : index
    %23 = vector.load %arg6[%c0_18, %c0_19, %c0_20] : memref<1x64x64xf32, #tpu.memory_space<vmem>>, vector<1x64x64xf32>
    tpu.vector_store %arg6[%c0_18, %c0_19, %c0_20], %22 {strides = array<i32>} : memref<1x64x64xf32, #tpu.memory_space<vmem>>, vector<1x64x64xf32>,
    return
  }
  func.func @transform_0(%arg0: i32) -> (i32, i32, i32) {
    %c0_i32 = arith.constant 0 : i32
    %c0_i32_0 = arith.constant 0 : i32
    %c0_i32_1 = arith.constant 0 : i32
    return %arg0, %c0_i32, %c0_i32_0 : i32, i32, i32
  }
  func.func @transform_1(%arg0: i32) -> (i32, i32) {
    %c0_i32 = arith.constant 0 : i32
    %c0_i32_0 = arith.constant 0 : i32
    %c0_i32_1 = arith.constant 0 : i32
    return %c0_i32, %c0_i32_0 : i32, i32
  }
  func.func @transform_2(%arg0: i32) -> (i32, i32) {
    %c0_i32 = arith.constant 0 : i32
    %c0_i32_0 = arith.constant 0 : i32
    %c0_i32_1 = arith.constant 0 : i32
    return %c0_i32, %c0_i32_0 : i32, i32
  }
  func.func @transform_3(%arg0: i32) -> (i32, i32) {
    %c0_i32 = arith.constant 0 : i32
    %c0_i32_0 = arith.constant 0 : i32
    %c0_i32_1 = arith.constant 0 : i32
    return %c0_i32, %c0_i32_0 : i32, i32
  }
  func.func @transform_4(%arg0: i32) -> (i32, i32) {
    %c0_i32 = arith.constant 0 : i32
    %c0_i32_0 = arith.constant 0 : i32
    %c0_i32_1 = arith.constant 0 : i32
    return %c0_i32, %c0_i32_0 : i32, i32
  }
  func.func @transform_5(%arg0: i32) -> (i32, i32, i32) {
    %c0_i32 = arith.constant 0 : i32
    %c0_i32_0 = arith.constant 0 : i32
    %c0_i32_1 = arith.constant 0 : i32
    return %arg0, %c0_i32, %c0_i32_0 : i32, i32, i32
  }
}

</mosaic_0001>

<llo_original>
// kernel: tpu_custom_call.1
$region0: #{tpu_custom_call.1}
  #allocation0 [shape = 'u32[]', space=smem, size = 0x4, offset = 0x4, fixed_abs, tag = 'smem constant byte address 0x4 - core index']
  #allocation1 [shape = 'u32[144,128]{1,0:T(1,128)}', space=vmem, size = 0x12000, scoped, tag = 'internal scratch']
  %s0 = inlined_call_operand.hbm [shape: f32[2,64,64], index: 0, kind: input, shape index: {}]
  %s1 = inlined_call_operand.vmem [shape: f32[64,4], index: 1, kind: input, shape index: {}]
  %s2 = inlined_call_operand.vmem [shape: f32[1,4], index: 2, kind: input, shape index: {}]
  %s3 = inlined_call_operand.vmem [shape: f32[4,64], index: 3, kind: input, shape index: {}]
  %s4 = inlined_call_operand.vmem [shape: f32[1,64], index: 4, kind: input, shape index: {}]
  %s5 = inlined_call_operand.hbm [shape: f32[2,64,64], index: 5, kind: output, shape index: {}]
  %s6 = sld [smem:[#allocation0]]
  $region57: #{tpu_custom_call.1} parent=0
    _
  %s8 = ssub.s32 1, %s6
  %s9 = scalar_select 0, %s8, %s6
  $region1: #{tpu_custom_call.1} parent=0
    #allocation2 [shape = 'u8[65536]{0}', space=vmem, size = 0x10000, scoped, tag = 'input window, operand 0']
    #allocation3 [shape = 's32[2]{0}', space=sflag, size = 0x8, scoped, tag = 'scoped memory for tpu_custom_call.1']
    #allocation4 [shape = 's32[2]{0}', space=sflag, size = 0x8, scoped, tag = 'scoped memory for tpu_custom_call.1']
    #allocation5 [shape = 'u8[65536]{0}', space=vmem, size = 0x10000, scoped, tag = 'output window, operand 0']
    %10 = vsyncpa [#allocation3], 0
    %s11 = scalar_lea.sflag [#allocation3], 1
    %12 = vsyncpa %s11, 0
    %13 = vsyncpa [#allocation4], 0
    %s14 = scalar_lea.sflag [#allocation4], 1
    %15 = vsyncpa %s14, 0
    loop: start=0, step=1, limit=4
    $region2: #{tpu_custom_call.1} parent=1 // loop_pre_header
      _
    $region3: #{tpu_custom_call.1} parent=1 // loop_header
      %s17 = sphi 0, %s21
      %p18 = scmp.ge.s32.totalorder %s17, 4
      %s27 = sphi 0, %s29
      %s30 = sphi 0, %s27
      %s31 = sphi 0, %s30
      %s47 = sphi 0, %s31
      %s51 = sphi 0, %s51
      %s53 = sphi 0, %s51
      %s54 = sphi 0, %s53
      %s68 = sphi 0, %s54
      %s72 = sphi 0, %s72
      %s74 = sphi 0, %s72
      %s75 = sphi 0, %s74
      %s89 = sphi 0, %s75
      %s93 = sphi 0, %s93
      %s95 = sphi 0, %s93
      %s96 = sphi 0, %s95
      %s110 = sphi 0, %s96
      %s114 = sphi 0, %s114
      %s116 = sphi 0, %s114
      %s117 = sphi 0, %s116
      %s131 = sphi 0, %s117
      %s137 = sphi 0, %s139
      %s140 = sphi 0, %s137
      %s141 = sphi 0, %s140
      %s157 = sphi 0, %s141
    $region4: #{tpu_custom_call.1} parent=1 // loop_header_branch
      %20 = sbr.rel (%p18) target = $region8
    $region5: #{tpu_custom_call.1} parent=1 // loop_body
      %s22 = ssub.s32 %s17, 1
      %s23 = ssub.s32 %s17, 2
      %s24 = sadd.s32 %s17, 1
      %s25 = ssub.s32 %s17, %s24
      %p26 = scmp.eq.s32.totalorder %s25, 0
      %s28 = sadd.s32 %s27, 1
      %s29 = scalar_select %p26, %s27, %s28
      %p32 = pneg %p26
      %p33 = scmp.eq.s32.totalorder %s17, 1
      %p34 = por %p32, %p33
      %p35 = scmp.ne.s32.totalorder %s27, %s30
      %p36 = scmp.eq.s32.totalorder %s17, 0
      %p37 = por %p35, %p36
      %p38 = scmp.ne.s32.totalorder %s27, %s30
      %p39 = scmp.eq.s32.totalorder %s22, 1
      %p40 = por %p38, %p39
      %p41 = scmp.ne.s32.totalorder %s30, %s31
      %p42 = scmp.eq.s32.totalorder %s22, 0
      %p43 = por %p41, %p42
      %p44 = scmp.ne.s32.totalorder %s30, %s31
      %p45 = scmp.eq.s32.totalorder %s23, 1
      %p46 = por %p44, %p45
      %p48 = scmp.ne.s32.totalorder %s31, %s47
      %p49 = scmp.eq.s32.totalorder %s23, 0
      %p50 = por %p48, %p49
      %s52 = sadd.s32 %s51, 1
      %p55 = scmp.eq.s32.totalorder %s17, 1
      %p56 = scmp.ne.s32.totalorder %s51, %s53
      %p57 = scmp.eq.s32.totalorder %s17, 0
      %p58 = por %p56, %p57
      %p59 = scmp.ne.s32.totalorder %s51, %s53
      %p60 = scmp.eq.s32.totalorder %s22, 1
      %p61 = por %p59, %p60
      %p62 = scmp.ne.s32.totalorder %s53, %s54
      %p63 = scmp.eq.s32.totalorder %s22, 0
      %p64 = por %p62, %p63
      %p65 = scmp.ne.s32.totalorder %s53, %s54
      %p66 = scmp.eq.s32.totalorder %s23, 1
      %p67 = por %p65, %p66
      %p69 = scmp.ne.s32.totalorder %s54, %s68
      %p70 = scmp.eq.s32.totalorder %s23, 0
      %p71 = por %p69, %p70
      %s73 = sadd.s32 %s72, 1
      %p76 = scmp.eq.s32.totalorder %s17, 1
      %p77 = scmp.ne.s32.totalorder %s72, %s74
      %p78 = scmp.eq.s32.totalorder %s17, 0
      %p79 = por %p77, %p78
      %p80 = scmp.ne.s32.totalorder %s72, %s74
      %p81 = scmp.eq.s32.totalorder %s22, 1
      %p82 = por %p80, %p81
      %p83 = scmp.ne.s32.totalorder %s74, %s75
      %p84 = scmp.eq.s32.totalorder %s22, 0
      %p85 = por %p83, %p84
      %p86 = scmp.ne.s32.totalorder %s74, %s75
      %p87 = scmp.eq.s32.totalorder %s23, 1
      %p88 = por %p86, %p87
      %p90 = scmp.ne.s32.totalorder %s75, %s89
      %p91 = scmp.eq.s32.totalorder %s23, 0
      %p92 = por %p90, %p91
      %s94 = sadd.s32 %s93, 1
      %p97 = scmp.eq.s32.totalorder %s17, 1
      %p98 = scmp.ne.s32.totalorder %s93, %s95
      %p99 = scmp.eq.s32.totalorder %s17, 0
      %p100 = por %p98, %p99
      %p101 = scmp.ne.s32.totalorder %s93, %s95
      %p102 = scmp.eq.s32.totalorder %s22, 1
      %p103 = por %p101, %p102
      %p104 = scmp.ne.s32.totalorder %s95, %s96
      %p105 = scmp.eq.s32.totalorder %s22, 0
      %p106 = por %p104, %p105
      %p107 = scmp.ne.s32.totalorder %s95, %s96
      %p108 = scmp.eq.s32.totalorder %s23, 1
      %p109 = por %p107, %p108
      %p111 = scmp.ne.s32.totalorder %s96, %s110
      %p112 = scmp.eq.s32.totalorder %s23, 0
      %p113 = por %p111, %p112
      %s115 = sadd.s32 %s114, 1
      %p118 = scmp.eq.s32.totalorder %s17, 1
      %p119 = scmp.ne.s32.totalorder %s114, %s116
      %p120 = scmp.eq.s32.totalorder %s17, 0
      %p121 = por %p119, %p120
      %p122 = scmp.ne.s32.totalorder %s114, %s116
      %p123 = scmp.eq.s32.totalorder %s22, 1
      %p124 = por %p122, %p123
      %p125 = scmp.ne.s32.totalorder %s116, %s117
      %p126 = scmp.eq.s32.totalorder %s22, 0
      %p127 = por %p125, %p126
      %p128 = scmp.ne.s32.totalorder %s116, %s117
      %p129 = scmp.eq.s32.totalorder %s23, 1
      %p130 = por %p128, %p129
      %p132 = scmp.ne.s32.totalorder %s117, %s131
      %p133 = scmp.eq.s32.totalorder %s23, 0
      %p134 = por %p132, %p133
      %s135 = ssub.s32 %s17, %s24
      %p136 = scmp.eq.s32.totalorder %s135, 0
      %s138 = sadd.s32 %s137, 1
      %s139 = scalar_select %p136, %s137, %s138
      %p142 = pneg %p136
      %p143 = scmp.eq.s32.totalorder %s17, 1
      %p144 = por %p142, %p143
      %p145 = scmp.ne.s32.totalorder %s137, %s140
      %p146 = scmp.eq.s32.totalorder %s17, 0
      %p147 = por %p145, %p146
      %p148 = scmp.ne.s32.totalorder %s137, %s140
      %p149 = scmp.eq.s32.totalorder %s22, 1
      %p150 = por %p148, %p149
      %p151 = scmp.ne.s32.totalorder %s140, %s141
      %p152 = scmp.eq.s32.totalorder %s22, 0
      %p153 = por %p151, %p152
      %p154 = scmp.ne.s32.totalorder %s140, %s141
      %p155 = scmp.eq.s32.totalorder %s23, 1
      %p156 = por %p154, %p155
      %p158 = scmp.ne.s32.totalorder %s141, %s157
      %p159 = scmp.eq.s32.totalorder %s23, 0
      %p160 = por %p158, %p159
      %p161 = scmp.le.s32.totalorder 1, %s17
      %p162 = scmp.lt.s32.totalorder %s17, 3
      %p163 = pnand %p161, %p162
      %p164 = pneg %p163
      // Predicated region
      $region9: #{tpu_custom_call.1} parent=5 // pred_check
        _
      $region10: #{tpu_custom_call.1} parent=5 // pred_check_branch
        %166 = sbr.rel (%p163) target = $region12
      $region11: #{tpu_custom_call.1} parent=5 // pred_region
        %s167 = ssub.s32 %s17, 1
        // Predicated region
        $region13: #{tpu_custom_call.1} parent=11 // pred_check
          %p168 = pneg %p64
        $region14: #{tpu_custom_call.1} parent=11 // pred_check_branch
          %170 = sbr.rel (%p168) target = $region16
        $region15: #{tpu_custom_call.1} parent=11 // pred_region
          _
        $region16: #{tpu_custom_call.1} parent=11 // pred_fallthru
          _
        // Predicated region
        $region17: #{tpu_custom_call.1} parent=11 // pred_check
          %p171 = pneg %p85
        $region18: #{tpu_custom_call.1} parent=11 // pred_check_branch
          %173 = sbr.rel (%p171) target = $region20
        $region19: #{tpu_custom_call.1} parent=11 // pred_region
          _
        $region20: #{tpu_custom_call.1} parent=11 // pred_fallthru
          _
        // Predicated region
        $region21: #{tpu_custom_call.1} parent=11 // pred_check
          %p174 = pneg %p106
        $region22: #{tpu_custom_call.1} parent=11 // pred_check_branch
          %176 = sbr.rel (%p174) target = $region24
        $region23: #{tpu_custom_call.1} parent=11 // pred_region
          _
        $region24: #{tpu_custom_call.1} parent=11 // pred_fallthru
          _
        // Predicated region
        $region25: #{tpu_custom_call.1} parent=11 // pred_check
          %p177 = pneg %p127
        $region26: #{tpu_custom_call.1} parent=11 // pred_check_branch
          %179 = sbr.rel (%p177) target = $region28
        $region27: #{tpu_custom_call.1} parent=11 // pred_region
          _
        $region28: #{tpu_custom_call.1} parent=11 // pred_fallthru
          _
      $region12: #{tpu_custom_call.1} parent=5 // pred_fallthru
        _
      %p180 = scmp.lt.s32.totalorder %s17, 2
      // Predicated region
      $region29: #{tpu_custom_call.1} parent=5 // pred_check
        %p181 = pneg %p180
      $region30: #{tpu_custom_call.1} parent=5 // pred_check_branch
        %183 = sbr.rel (%p181) target = $region32
      $region31: #{tpu_custom_call.1} parent=5 // pred_region
        // Predicated region
        $region33: #{tpu_custom_call.1} parent=31 // pred_check
          %p184 = pneg %p37
        $region34: #{tpu_custom_call.1} parent=31 // pred_check_branch
          %186 = sbr.rel (%p184) target = $region36
        $region35: #{tpu_custom_call.1} parent=31 // pred_region
          %s187 = sand.u32 %s27, 1
          %s188 = scalar_lea.sflag [#allocation3], %s187
          %s189 = sand.u32 %s27, 1
          %s190 = smul.addr %s189, 64
          %s191 = scalar_lea.vmem [#allocation2], %s190
          %s193 = ssub.s32 1024, 1024
          %194 = vsyncadd %s188, %s193
          %s195 = smul.addr %s17, 8
          %s196 = smul.addr %s195, 128
          %s197 = scalar_lea.hbm %s0, %s196
          %s198 = sshll.u32 %s191, 4
          %s199 = int_to_ptr.vmem [resolvable:$true] %s198
          %204 = dma.hbm_to_vmem [thread:$0]  %s197, 1024, %s199, %s188, 128, 128, 8
        $region36: #{tpu_custom_call.1} parent=31 // pred_fallthru
          _
      $region32: #{tpu_custom_call.1} parent=5 // pred_fallthru
        _
      %p205 = scmp.le.s32.totalorder 1, %s17
      %p206 = scmp.lt.s32.totalorder %s17, 3
      %p207 = pnand %p205, %p206
      %p208 = pneg %p207
      // Predicated region
      $region37: #{tpu_custom_call.1} parent=5 // pred_check
        _
      $region38: #{tpu_custom_call.1} parent=5 // pred_check_branch
        %210 = sbr.rel (%p207) target = $region40
      $region39: #{tpu_custom_call.1} parent=5 // pred_region
        %s211 = ssub.s32 %s17, 1
        %s212 = sand.u32 %s30, 1
        %s213 = scalar_lea.sflag [#allocation3], %s212
        %s214 = sand.u32 %s30, 1
        %s215 = smul.addr %s214, 64
        %s216 = scalar_lea.vmem [#allocation2], %s215
        // Predicated region
        $region41: #{tpu_custom_call.1} parent=39 // pred_check
          %p217 = pneg %p43
        $region42: #{tpu_custom_call.1} parent=39 // pred_check_branch
          %219 = sbr.rel (%p217) target = $region44
        $region43: #{tpu_custom_call.1} parent=39 // pred_region
          %220 = dma.done %s213, 1024
        $region44: #{tpu_custom_call.1} parent=39 // pred_fallthru
          _
        %s221 = sand.u32 %s30, 1
        %s222 = scalar_lea.sflag [#allocation3], %s221
        %s223 = sand.u32 %s30, 1
        %s224 = smul.addr %s223, 64
        %s225 = scalar_lea.vmem [#allocation2], %s224
        %p226 = pneg %p43
        %p227 = pneg %p40
        %p228 = pneg %p64
        %p229 = pneg %p61
        %p230 = pneg %p85
        %p231 = pneg %p82
        %p232 = pneg %p106
        %p233 = pneg %p103
        %p234 = pneg %p127
        %p235 = pneg %p124
        %p236 = pneg %p153
        %p237 = pneg %p150
        %s238 = sand.u32 %s140, 1
        %s239 = scalar_lea.sflag [#allocation4], %s238
        %s240 = sand.u32 %s140, 1
        %s241 = smul.addr %s240, 64
        %s242 = scalar_lea.vmem [#allocation5], %s241
        %v243 = vld [vmem:[%s216] sm:$0xff]
        %v244 = vld [vmem:[%s216 + $0x8] sm:$0xff]
        %v245 = vld [vmem:[%s216 + $0x10] sm:$0xff]
        %v246 = vld [vmem:[%s216 + $0x18] sm:$0xff]
        %v247 = vld [vmem:[%s216 + $0x20] sm:$0xff]
        %v248 = vld [vmem:[%s216 + $0x28] sm:$0xff]
        %v249 = vld [vmem:[%s216 + $0x30] sm:$0xff]
        %v250 = vld [vmem:[%s216 + $0x38] sm:$0xff]
        %vm251 = vcmask 523264
        %v252 = vsel %vm251, %v243, 0.0
        %253 = vadd.xlane.f32.xlu0 %v252
        %v254 = vpop.xlane.xlu0 %253
        %v255 = vsel %vm251, %v244, 0.0
        %256 = vadd.xlane.f32.xlu0 %v255
        %v257 = vpop.xlane.xlu0 %256
        %v258 = vsel %vm251, %v245, 0.0
        %259 = vadd.xlane.f32.xlu0 %v258
        %v260 = vpop.xlane.xlu0 %259
        %v261 = vsel %vm251, %v246, 0.0
        %262 = vadd.xlane.f32.xlu0 %v261
        %v263 = vpop.xlane.xlu0 %262
        %v264 = vsel %vm251, %v247, 0.0
        %265 = vadd.xlane.f32.xlu0 %v264
        %v266 = vpop.xlane.xlu0 %265
        %v267 = vsel %vm251, %v248, 0.0
        %268 = vadd.xlane.f32.xlu0 %v267
        %v269 = vpop.xlane.xlu0 %268
        %v270 = vsel %vm251, %v249, 0.0
        %271 = vadd.xlane.f32.xlu0 %v270
        %v272 = vpop.xlane.xlu0 %271
        %v273 = vsel %vm251, %v250, 0.0
        %274 = vadd.xlane.f32.xlu0 %v273
        %v275 = vpop.xlane.xlu0 %274
        %v276 = vmul.f32 %v254, 0.015625
        %v277 = vmul.f32 %v257, 0.015625
        %v278 = vmul.f32 %v260, 0.015625
        %v279 = vmul.f32 %v263, 0.015625
        %v280 = vmul.f32 %v266, 0.015625
        %v281 = vmul.f32 %v269, 0.015625
        %v282 = vmul.f32 %v272, 0.015625
        %v283 = vmul.f32 %v275, 0.015625
        %v284 = vld [vmem:[%s1] sm:$0xff]
        %v285 = vld [vmem:[%s1 + $0x8] sm:$0xff]
        %v286 = vld [vmem:[%s1 + $0x10] sm:$0xff]
        %v287 = vld [vmem:[%s1 + $0x18] sm:$0xff]
        %v288 = vld [vmem:[%s1 + $0x20] sm:$0xff]
        %v289 = vld [vmem:[%s1 + $0x28] sm:$0xff]
        %v290 = vld [vmem:[%s1 + $0x30] sm:$0xff]
        %v291 = vld [vmem:[%s1 + $0x38] sm:$0xff]
        %v292 = vld [vmem:[%s2] sm:$0x1]
        %v301 = vlaneseq
        %v302 = vand.u32 %v301, 127
        %v303 = vlaneseq
        %v304 = vshrl.u32 %v303, 7
        %v305 = vsub.s32 %v302, %v304
        %v306 = vrot.slane %v276, %v305
        %v307 = vadd.s32 %v302, 4294967288
        %v308 = vlaneseq
        %v309 = vshrl.u32 %v308, 7
        %v310 = vsub.s32 %v307, %v309
        %v311 = vrot.slane %v277, %v310
        %vm312 = vcmask 130112
        %v313 = vsel %vm312, %v311, %v306
        %v314 = vadd.s32 %v302, 4294967280
        %v315 = vlaneseq
        %v316 = vshrl.u32 %v315, 7
        %v317 = vsub.s32 %v314, %v316
        %v318 = vrot.slane %v278, %v317
        %vm319 = vcmask 195712
        %v320 = vsel %vm319, %v318, %v313
        %v321 = vadd.s32 %v302, 4294967272
        %v322 = vlaneseq
        %v323 = vshrl.u32 %v322, 7
        %v324 = vsub.s32 %v321, %v323
        %v325 = vrot.slane %v279, %v324
        %vm326 = vcmask 261312
        %v327 = vsel %vm326, %v325, %v320
        %v328 = vadd.s32 %v302, 4294967264
        %v329 = vlaneseq
        %v330 = vshrl.u32 %v329, 7
        %v331 = vsub.s32 %v328, %v330
        %v332 = vrot.slane %v280, %v331
        %vm333 = vcmask 326912
        %v334 = vsel %vm333, %v332, %v327
        %v335 = vadd.s32 %v302, 4294967256
        %v336 = vlaneseq
        %v337 = vshrl.u32 %v336, 7
        %v338 = vsub.s32 %v335, %v337
        %v339 = vrot.slane %v281, %v338
        %vm340 = vcmask 392512
        %v341 = vsel %vm340, %v339, %v334
        %v342 = vadd.s32 %v302, 4294967248
        %v343 = vlaneseq
        %v344 = vshrl.u32 %v343, 7
        %v345 = vsub.s32 %v342, %v344
        %v346 = vrot.slane %v282, %v345
        %vm347 = vcmask 458112
        %v348 = vsel %vm347, %v346, %v341
        %v349 = vadd.s32 %v302, 4294967240
        %v350 = vlaneseq
        %v351 = vshrl.u32 %v350, 7
        %v352 = vsub.s32 %v349, %v351
        %v353 = vrot.slane %v283, %v352
        %vm354 = vcmask 523712
        %v355 = vsel %vm354, %v353, %v348
        %v356 = vsel %vm251, %v355, 0
        %358 = vmatprep.subr.mxu0 0.0
        %359 = vmatpush1.msra.mxu0 %v284
        %360 = vmatprep.subr.mxu0 0.0
        %361 = vmatpush1.msra.mxu0 %v285
        %362 = vmatprep.subr.mxu0 0.0
        %363 = vmatpush1.msra.mxu0 %v286
        %364 = vmatprep.subr.mxu0 0.0
        %365 = vmatpush1.msra.mxu0 %v287
        %366 = vmatprep.subr.mxu0 0.0
        %367 = vmatpush1.msra.mxu0 %v288
        %368 = vmatprep.subr.mxu0 0.0
        %369 = vmatpush1.msra.mxu0 %v289
        %370 = vmatprep.subr.mxu0 0.0
        %371 = vmatpush1.msra.mxu0 %v290
        %372 = vmatprep.subr.mxu0 0.0
        %373 = vmatpush1.msra.mxu0 %v291
        %374 = vmatprep.subr.mxu0 0.0
        %375 = vmatpush1.msra.mxu0 0.0
        %376 = vmatprep.subr.mxu0 0.0
        %377 = vmatpush1.msra.mxu0 0.0
        %378 = vmatprep.subr.mxu0 0.0
        %379 = vmatpush1.msra.mxu0 0.0
        %380 = vmatprep.subr.mxu0 0.0
        %381 = vmatpush1.msra.mxu0 0.0
        %382 = vmatprep.subr.mxu0 0.0
        %383 = vmatpush1.msra.mxu0 0.0
        %384 = vmatprep.subr.mxu0 0.0
        %385 = vmatpush1.msra.mxu0 0.0
        %386 = vmatprep.subr.mxu0 0.0
        %387 = vmatpush1.msra.mxu0 0.0
        %388 = vmatprep.subr.mxu0 0.0
        %389 = vmatpush1.msra.mxu0 0.0
        %390 = vmatprep.subr.mxu0 0.0
        %391 = vmatpush1.msra.mxu0 0.0
        %392 = vmatprep.subr.mxu0 0.0
        %393 = vmatpush1.msra.mxu0 0.0
        %394 = vmatprep.subr.mxu0 0.0
        %395 = vmatpush1.msra.mxu0 0.0
        %396 = vmatprep.subr.mxu0 0.0
        %397 = vmatpush1.msra.mxu0 0.0
        %398 = vmatprep.subr.mxu0 0.0
        %399 = vmatpush1.msra.mxu0 0.0
        %400 = vmatprep.subr.mxu0 0.0
        %401 = vmatpush1.msra.mxu0 0.0
        %402 = vmatprep.subr.mxu0 0.0
        %403 = vmatpush1.msra.mxu0 0.0
        %404 = vmatprep.subr.mxu0 0.0
        %405 = vmatpush1.msra.mxu0 0.0
        %406 = vmatprep.subr.mxu0 0.0
        %407 = vmatpush1.msra.mxu0 0.0
        %408 = vmatprep.subr.mxu0 0.0
        %409 = vmatpush1.msra.mxu0 0.0
        %410 = vmatprep.subr.mxu0 0.0
        %411 = vmatpush1.msra.mxu0 0.0
        %412 = vmatprep.subr.mxu0 0.0
        %413 = vmatpush1.msra.mxu0 0.0
        %414 = vmatprep.subr.mxu0 0.0
        %415 = vmatpush1.msra.mxu0 0.0
        %416 = vmatprep.subr.mxu0 0.0
        %417 = vmatpush1.msra.mxu0 0.0
        %418 = vmatprep.subr.mxu0 0.0
        %419 = vmatpush1.msra.mxu0 0.0
        %420 = vmatprep.subr.mxu0 0.0
        %421 = vmatpush1.msra.mxu0 0.0
        %422 = vmatprep.mubr.f32.mxu0 0.0
        %423 = vmatmul.mubr.f32.gmra.mrb[0].mxu0 %v356
        %v424 = vpop.f32.mrb[0].mxu0
        %v425 = vadd.f32 %v292, %v424
        %v426 = vpop.f32.mrb[0].mxu0
        %427 = vdwg.mxu0
        %v428 = vmax.f32 %v425, 0.0
        %v429 = vld [vmem:[%s3] sm:$0xf]
        %v430 = vld [vmem:[%s4] sm:$0x1]
        %vm431 = vcmask 31744
        %v433 = vsel %vm431, %v428, 0
        %vm435 = vcmask 1043456
        %v437 = vsel %vm435, %v429, 0
        %439 = vmatprep.subr.mxu0 0.0
        %440 = vmatpush1.msra.mxu0 %v437
        %441 = vmatprep.subr.mxu0 0.0
        %442 = vmatpush1.msra.mxu0 0.0
        %443 = vmatprep.subr.mxu0 0.0
        %444 = vmatpush1.msra.mxu0 0.0
        %445 = vmatprep.subr.mxu0 0.0
        %446 = vmatpush1.msra.mxu0 0.0
        %447 = vmatprep.subr.mxu0 0.0
        %448 = vmatpush1.msra.mxu0 0.0
        %449 = vmatprep.subr.mxu0 0.0
        %450 = vmatpush1.msra.mxu0 0.0
        %451 = vmatprep.subr.mxu0 0.0
        %452 = vmatpush1.msra.mxu0 0.0
        %453 = vmatprep.subr.mxu0 0.0
        %454 = vmatpush1.msra.mxu0 0.0
        %455 = vmatprep.subr.mxu0 0.0
        %456 = vmatpush1.msra.mxu0 0.0
        %457 = vmatprep.subr.mxu0 0.0
        %458 = vmatpush1.msra.mxu0 0.0
        %459 = vmatprep.subr.mxu0 0.0
        %460 = vmatpush1.msra.mxu0 0.0
        %461 = vmatprep.subr.mxu0 0.0
        %462 = vmatpush1.msra.mxu0 0.0
        %463 = vmatprep.subr.mxu0 0.0
        %464 = vmatpush1.msra.mxu0 0.0
        %465 = vmatprep.subr.mxu0 0.0
        %466 = vmatpush1.msra.mxu0 0.0
        %467 = vmatprep.subr.mxu0 0.0
        %468 = vmatpush1.msra.mxu0 0.0
        %469 = vmatprep.subr.mxu0 0.0
        %470 = vmatpush1.msra.mxu0 0.0
        %471 = vmatprep.subr.mxu0 0.0
        %472 = vmatpush1.msra.mxu0 0.0
        %473 = vmatprep.subr.mxu0 0.0
        %474 = vmatpush1.msra.mxu0 0.0
        %475 = vmatprep.subr.mxu0 0.0
        %476 = vmatpush1.msra.mxu0 0.0
        %477 = vmatprep.subr.mxu0 0.0
        %478 = vmatpush1.msra.mxu0 0.0
        %479 = vmatprep.subr.mxu0 0.0
        %480 = vmatpush1.msra.mxu0 0.0
        %481 = vmatprep.subr.mxu0 0.0
        %482 = vmatpush1.msra.mxu0 0.0
        %483 = vmatprep.subr.mxu0 0.0
        %484 = vmatpush1.msra.mxu0 0.0
        %485 = vmatprep.subr.mxu0 0.0
        %486 = vmatpush1.msra.mxu0 0.0
        %487 = vmatprep.subr.mxu0 0.0
        %488 = vmatpush1.msra.mxu0 0.0
        %489 = vmatprep.subr.mxu0 0.0
        %490 = vmatpush1.msra.mxu0 0.0
        %491 = vmatprep.subr.mxu0 0.0
        %492 = vmatpush1.msra.mxu0 0.0
        %493 = vmatprep.subr.mxu0 0.0
        %494 = vmatpush1.msra.mxu0 0.0
        %495 = vmatprep.subr.mxu0 0.0
        %496 = vmatpush1.msra.mxu0 0.0
        %497 = vmatprep.subr.mxu0 0.0
        %498 = vmatpush1.msra.mxu0 0.0
        %499 = vmatprep.subr.mxu0 0.0
        %500 = vmatpush1.msra.mxu0 0.0
        %501 = vmatprep.subr.mxu0 0.0
        %502 = vmatpush1.msra.mxu0 0.0
        %503 = vmatprep.mubr.f32.mxu0 0.0
        %504 = vmatmul.mubr.f32.gmra.mrb[0].mxu0 %v433
        %v505 = vpop.f32.mrb[0].mxu0
        %v506 = vadd.f32 %v430, %v505
        %v507 = vpop.f32.mrb[0].mxu0
        %508 = vdwg.mxu0
        %v509 = vxor.u32 %v506, 2147483648
        %v510 = vmul.f32 %v509, 1.442695
        %v511 = vpow.pop %v510
        %v512 = vadd.f32 %v511, 1.0
        %v513 = vrcp.pop %v512
        %v514 = vmul.f32 1.0, %v513
        %v515 = vlaneseq
        %v516 = vshrl.u32 %v515, 7
        %v517 = vsub.s32 0, %v516
        %v518 = vrot.slane %v514, %v517
        %520 = vbcast.lane.b32.xlu0 %v518, 256
        %v521 = vpop.permute.xlu0 %520
        %s523 = sor.u32 256, 8
        %524 = vbcast.lane.b32.xlu0 %v518, %s523
        %v525 = vpop.permute.xlu0 %524
        %s527 = sor.u32 256, 16
        %528 = vbcast.lane.b32.xlu0 %v518, %s527
        %v529 = vpop.permute.xlu0 %528
        %s531 = sor.u32 256, 24
        %532 = vbcast.lane.b32.xlu0 %v518, %s531
        %v533 = vpop.permute.xlu0 %532
        %s535 = sor.u32 256, 32
        %536 = vbcast.lane.b32.xlu0 %v518, %s535
        %v537 = vpop.permute.xlu0 %536
        %s539 = sor.u32 256, 40
        %540 = vbcast.lane.b32.xlu0 %v518, %s539
        %v541 = vpop.permute.xlu0 %540
        %s543 = sor.u32 256, 48
        %544 = vbcast.lane.b32.xlu0 %v518, %s543
        %v545 = vpop.permute.xlu0 %544
        %s547 = sor.u32 256, 56
        %548 = vbcast.lane.b32.xlu0 %v518, %s547
        %v549 = vpop.permute.xlu0 %548
        %v550 = vmul.f32 %v243, %v521
        %v551 = vmul.f32 %v244, %v525
        %v552 = vmul.f32 %v245, %v529
        %v553 = vmul.f32 %v246, %v533
        %v554 = vmul.f32 %v247, %v537
        %v555 = vmul.f32 %v248, %v541
        %v556 = vmul.f32 %v249, %v545
        %v557 = vmul.f32 %v250, %v549
        %558 = vst.msk [vmem:[%s242] sm:$0xff] %vm251, %v550
        %559 = vst.msk [vmem:[%s242 + $0x8] sm:$0xff] %vm251, %v551
        %560 = vst.msk [vmem:[%s242 + $0x10] sm:$0xff] %vm251, %v552
        %561 = vst.msk [vmem:[%s242 + $0x18] sm:$0xff] %vm251, %v553
        %562 = vst.msk [vmem:[%s242 + $0x20] sm:$0xff] %vm251, %v554
        %563 = vst.msk [vmem:[%s242 + $0x28] sm:$0xff] %vm251, %v555
        %564 = vst.msk [vmem:[%s242 + $0x30] sm:$0xff] %vm251, %v556
        %565 = vst.msk [vmem:[%s242 + $0x38] sm:$0xff] %vm251, %v557
        %s566 = sand.u32 %s140, 1
        %s567 = scalar_lea.sflag [#allocation4], %s566
        %s568 = sand.u32 %s140, 1
        %s569 = smul.addr %s568, 64
        %s570 = scalar_lea.vmem [#allocation5], %s569
        // Predicated region
        $region45: #{tpu_custom_call.1} parent=39 // pred_check
          %p571 = pneg %p150
        $region46: #{tpu_custom_call.1} parent=39 // pred_check_branch
          %573 = sbr.rel (%p571) target = $region48
        $region47: #{tpu_custom_call.1} parent=39 // pred_region
          %s575 = ssub.s32 1024, 1024
          %576 = vsyncadd %s567, %s575
          %s577 = smul.addr %s22, 8
          %s578 = smul.addr %s577, 128
          %s579 = scalar_lea.hbm %s5, %s578
          %s580 = sshll.u32 %s570, 4
          %s581 = int_to_ptr.vmem [resolvable:$true] %s580
          %586 = dma.vmem_to_hbm [thread:$0]  %s581, 1024, %s579, %s567, 128, 128, 8
        $region48: #{tpu_custom_call.1} parent=39 // pred_fallthru
          _
      $region40: #{tpu_custom_call.1} parent=5 // pred_fallthru
        _
      %p587 = scmp.le.s32.totalorder 2, %s17
      // Predicated region
      $region49: #{tpu_custom_call.1} parent=5 // pred_check
        %p588 = pneg %p587
      $region50: #{tpu_custom_call.1} parent=5 // pred_check_branch
        %590 = sbr.rel (%p588) target = $region52
      $region51: #{tpu_custom_call.1} parent=5 // pred_region
        %s591 = ssub.s32 %s17, 2
        // Predicated region
        $region53: #{tpu_custom_call.1} parent=51 // pred_check
          %p592 = pneg %p156
        $region54: #{tpu_custom_call.1} parent=51 // pred_check_branch
          %594 = sbr.rel (%p592) target = $region56
        $region55: #{tpu_custom_call.1} parent=51 // pred_region
          %s595 = sand.u32 %s141, 1
          %s596 = scalar_lea.sflag [#allocation4], %s595
          %s597 = sand.u32 %s141, 1
          %s598 = smul.addr %s597, 64
          %s599 = scalar_lea.vmem [#allocation5], %s598
          %600 = dma.done %s596, 1024
        $region56: #{tpu_custom_call.1} parent=51 // pred_fallthru
          _
      $region52: #{tpu_custom_call.1} parent=5 // pred_fallthru
        _
    $region6: #{tpu_custom_call.1} parent=1 // loop_footer
      %s21 = sadd.s32 1, %s17
    $region7: #{tpu_custom_call.1} parent=1 // loop_footer_branch
      %16 = sbr.rel target = $region3
    $region8: #{tpu_custom_call.1} parent=1 // loop_exit
      _
    %601 = vsyncpa [#allocation3], 1
    %s602 = scalar_lea.sflag [#allocation3], 1
    %603 = vsyncpa %s602, 1
    %604 = vsyncpa [#allocation4], 1
    %s605 = scalar_lea.sflag [#allocation4], 1
    %606 = vsyncpa %s605, 1

</llo_original>
